<compile_context>
chip_gen: v7x
topology: tpu7x:2x2x1
jax: 0.10.0
libtpu: 0.0.40
codegen_flags: <defaults>
</compile_context>

<pallas_src>
import functools

import jax
import jax.numpy as jnp
import numpy as np
from jax.experimental import pallas as pl
from jax.experimental.pallas import tpu as pltpu


def _round_up(v, m):
    return ((v + m - 1) // m) * m


# ---------------------------------------------------------------------------
# Fused kernel: per-chunk input projection + serial recurrence + final decoder.
# ---------------------------------------------------------------------------
def _make_kernel(T, B_p, L, mask_tail, unroll, mxu_dtype):
    f32 = jnp.float32

    def kernel(x_ref, h0_ref, wih_ref, bias_ref, whh_ref, wdec_ref, bdec_ref,
               dec_ref, hlast_ref, gi_scratch, h_scratch):
        c = pl.program_id(0)
        last = pl.num_programs(0) - 1

        @pl.when(c == 0)
        def _():
            h_scratch[...] = h0_ref[...]

        # One amortized, lane-dense matmul per chunk: gi for all T timesteps.
        # (Fused here -> gi never round-trips through HBM.)
        gi_scratch[...] = (
            jnp.dot(x_ref[...], wih_ref[...], preferred_element_type=f32)
            + bias_ref[...]
        )

        def make_step(masked):
            def step(t, h_prev):
                row = pl.multiple_of(t * B_p, B_p)
                gi_t = gi_scratch[pl.ds(row, B_p), :]
                h_t = jnp.maximum(
                    gi_t + jnp.dot(h_prev.astype(mxu_dtype), whh_ref[...],
                                   preferred_element_type=f32),
                    0.0)
                if masked:                        # only traced in the last chunk
                    h_t = jnp.where((c * T + t) < L, h_t, h_prev)
                return h_t
            return step

        if mask_tail:
            @pl.when(c != last)
            def _():
                h_scratch[...] = jax.lax.fori_loop(
                    0, T, make_step(False), h_scratch[...], unroll=unroll)

            @pl.when(c == last)
            def _():
                h_scratch[...] = jax.lax.fori_loop(
                    0, T, make_step(True), h_scratch[...], unroll=unroll)
        else:
            h_scratch[...] = jax.lax.fori_loop(
                0, T, make_step(False), h_scratch[...], unroll=unroll)

        @pl.when(c == last)
        def _():
            h = h_scratch[...]
            hlast_ref[...] = h
            dec_ref[...] = (
                jnp.dot(h.astype(mxu_dtype), wdec_ref[...],
                        preferred_element_type=f32)
                + bdec_ref[...]
            )

    return kernel


def generic_rnn_forward(x, h0, params, *, time_chunk=128, mxu_dtype=jnp.bfloat16):
    """x: (L, B, ninp); h0: (1, B, nhid).
    Returns (decoded (B, nout), hidden (1, B, nhid))."""
    L, B, ninp = x.shape
    nhid = params["w_hh"].shape[0]
    nout = params["w_dec"].shape[0]
    f32 = jnp.float32

    nhid_p = _round_up(nhid, 128)        # lane-dense hidden dim (zeros exact thru relu)
    nout_p = _round_up(nout, 128)        # lane-dense decoder output
    B_p = _round_up(B, 8)                # sublane-aligned batch (padded rows sliced off)

    # ---- one-time layout plumbing: transpose, zero-pad, fold biases, cast ---
    wih_t = (jnp.zeros((ninp, nhid_p), f32)
             .at[:, :nhid].set(params["w_ih"].T.astype(f32))).astype(mxu_dtype)
    whh_t = (jnp.zeros((nhid_p, nhid_p), f32)
             .at[:nhid, :nhid].set(params["w_hh"].T.astype(f32))).astype(mxu_dtype)
    bias = (jnp.zeros((1, nhid_p), f32)
            .at[:, :nhid].set((params["b_ih"] + params["b_hh"]).reshape(1, -1).astype(f32)))
    wdec_t = (jnp.zeros((nhid_p, nout_p), f32)
              .at[:nhid, :nout].set(params["w_dec"].T.astype(f32))).astype(mxu_dtype)
    bdec = (jnp.zeros((1, nout_p), f32)
            .at[:, :nout].set(params["b_dec"].reshape(1, -1).astype(f32)))
    h0_p = jnp.zeros((B_p, nhid_p), f32).at[:B, :nhid].set(h0[0].astype(f32))

    # ---- pick T so per-chunk VMEM fits a v7x-safe budget ---------------------
    itemsize = np.dtype(mxu_dtype).itemsize
    vmem_budget = 48 << 20               # < v7x's 64 MiB physical VMEM

    def _chunk_bytes(t):
        x_buf = 2 * t * B_p * ninp * itemsize      # double-buffered x chunk
        gi = t * B_p * nhid_p * 4                  # f32 gi scratch
        return x_buf + gi

    resident = (2 * (nhid_p * nhid_p + ninp * nhid_p + nhid_p * nout_p) * itemsize
                + 2 * (nhid_p + nout_p) * 4
                + 2 * B_p * (2 * nhid_p + nout_p) * 4)

    T = max(1, min(time_chunk, L))
    while T > 8 and resident + _chunk_bytes(T) > int(0.75 * vmem_budget):
        T = max(8, (T + 1) // 2)

    num_chunks = -(-L // T)
    Lp = num_chunks * T
    mask_tail = Lp != L

    # Pad time & batch, cast x for the MXU (halves x HBM traffic in bf16).
    x_p = jnp.zeros((Lp, B_p, ninp), mxu_dtype).at[:L, :B, :].set(x.astype(mxu_dtype))
    x2 = x_p.reshape(Lp * B_p, ninp)     # time-major rows; chunk c = rows [c*T*B_p, ...)

    unroll = True if T <= 64 else 8
    kernel = _make_kernel(T, B_p, L, mask_tail, unroll, mxu_dtype)

    grid_spec = pltpu.PrefetchScalarGridSpec(
        num_scalar_prefetch=0,
        grid=(num_chunks,),
        in_specs=[
            pl.BlockSpec((T * B_p, ninp), lambda c: (c, 0)),     # x chunk (pipelined)
            pl.BlockSpec((B_p, nhid_p), lambda c: (0, 0)),       # h0 (used at c==0)
            pl.BlockSpec((ninp, nhid_p), lambda c: (0, 0)),      # W_ih^T  (resident)
            pl.BlockSpec((1, nhid_p), lambda c: (0, 0)),         # b_ih+b_hh
            pl.BlockSpec((nhid_p, nhid_p), lambda c: (0, 0)),    # W_hh^T  (resident)
            pl.BlockSpec((nhid_p, nout_p), lambda c: (0, 0)),    # W_dec^T
            pl.BlockSpec((1, nout_p), lambda c: (0, 0)),         # b_dec
        ],
        out_specs=[
            pl.BlockSpec((B_p, nout_p), lambda c: (0, 0)),       # decoded (resident)
            pl.BlockSpec((B_p, nhid_p), lambda c: (0, 0)),       # final hidden (resident)
        ],
        scratch_shapes=[
            pltpu.VMEM((T * B_p, nhid_p), f32),                  # per-chunk gi
            pltpu.VMEM((B_p, nhid_p), f32),                      # h carry across chunks
        ],
    )

    decoded_p, hlast_p = pl.pallas_call(
        kernel,
        out_shape=(
            jax.ShapeDtypeStruct((B_p, nout_p), f32),
            jax.ShapeDtypeStruct((B_p, nhid_p), f32),
        ),
        grid_spec=grid_spec,
        compiler_params=pltpu.CompilerParams(
            dimension_semantics=("arbitrary",),   # time recurrence is sequential
            vmem_limit_bytes=vmem_budget,
        ),
    )(x2, h0_p, wih_t, bias, whh_t, wdec_t, bdec)

    decoded = decoded_p[:B, :nout]
    hidden = hlast_p[:B, :nhid][None]             # (1, B, nhid)
    return decoded, hidden


def _ref_forward(x, h0, p):
    """Pure-JAX reference mirroring the PyTorch forward."""
    def step(h, x_t):
        h_new = jax.nn.relu(x_t @ p["w_ih"].T + p["b_ih"][0]
                            + h @ p["w_hh"].T + p["b_hh"][0])
        return h_new, h_new
    h_last, hs = jax.lax.scan(step, h0[0], x)
    decoded_all = hs @ p["w_dec"].T + p["b_dec"][0]
    return decoded_all[-1], h_last[None]


if __name__ == "__main__":
    # Small shapes consistent with the module's forward.
    L, B, NINP, NHID, NOUT = 8, 2, 4, 32, 1        # NOUT plays the role of out_dist.ndim

    key = jax.random.PRNGKey(0)
    k_x, k1, k2, k3, k4, k5 = jax.random.split(key, 6)
    k = 1.0 / jnp.sqrt(NHID)                       # PyTorch nn.RNN / nn.Linear init range

    params = {
        "w_ih": jax.random.uniform(k1, (NHID, NINP), jnp.float32, -k, k),
        "w_hh": jax.random.uniform(k2, (NHID, NHID), jnp.float32, -k, k),
        "b_ih": jax.random.uniform(k3, (1, NHID), jnp.float32, -k, k),
        "b_hh": jax.random.uniform(k4, (1, NHID), jnp.float32, -k, k),
        "w_dec": jax.random.uniform(k5, (NOUT, NHID), jnp.float32, -k, k),
        "b_dec": jnp.zeros((1, NOUT), jnp.float32),  # init_weights(): decoder.bias.zero_()
    }

    x = jax.random.normal(k_x, (L, B, NINP), jnp.float32)
    h0 = jnp.zeros((1, B, NHID), jnp.float32)        # init_hidden()

    dec_ref, hid_ref = _ref_forward(x, h0, params)

    # 1) Exact-semantics check: f32 MXU path.
    fwd_f32 = jax.jit(functools.partial(generic_rnn_forward, mxu_dtype=jnp.float32))
    d32, h32 = fwd_f32(x, h0, params)
    d32, h32 = jax.block_until_ready((d32, h32))
    assert d32.shape == (B, NOUT) and h32.shape == (1, B, NHID)
    assert jnp.allclose(d32, dec_ref, atol=1e-4, rtol=1e-4)
    assert jnp.allclose(h32, hid_ref, atol=1e-4, rtol=1e-4)

    # 2) Production path: bf16 weights / x at the MXU, f32 carry + accumulation.
    fwd_bf16 = jax.jit(functools.partial(generic_rnn_forward, mxu_dtype=jnp.bfloat16))
    dbf, hbf = fwd_bf16(x, h0, params)
    dbf, hbf = jax.block_until_ready((dbf, hbf))
    assert dbf.shape == (B, NOUT) and hbf.shape == (1, B, NHID)
    assert jnp.allclose(dbf, dec_ref, atol=5e-2, rtol=5e-2)
    assert jnp.allclose(hbf, hid_ref, atol=5e-2, rtol=5e-2)

    print("KERNEL_OK")
</pallas_src>

<mosaic_0001>
module attributes {stable_mosaic.version = 11 : i64} {
  func.func @kernel(%arg0: i32, %arg1: memref<64x4xf32, #tpu.memory_space<vmem>>, %arg2: memref<8x128xf32, #tpu.memory_space<vmem>>, %arg3: memref<4x128xf32, #tpu.memory_space<vmem>>, %arg4: memref<1x128xf32, #tpu.memory_space<vmem>>, %arg5: memref<128x128xf32, #tpu.memory_space<vmem>>, %arg6: memref<128x128xf32, #tpu.memory_space<vmem>>, %arg7: memref<1x128xf32, #tpu.memory_space<vmem>>, %arg8: memref<8x128xf32, #tpu.memory_space<vmem>>, %arg9: memref<8x128xf32, #tpu.memory_space<vmem>>, %arg10: memref<64x128xf32, #tpu.memory_space<vmem>>, %arg11: memref<8x128xf32, #tpu.memory_space<vmem>>) attributes {dimension_semantics = [#tpu.dimension_semantics<arbitrary>], iteration_bounds = array<i64: 1>, scalar_prefetch = 0 : i64, scratch_operands = 2 : i64, tpu.core_type = #tpu.core_type<tc>, window_params = [{transform_indices = @transform_0, window_bounds = array<i64: 64, 4>}, {pipeline_mode = #tpu.pipeline_mode<synchronous>, transform_indices = @transform_1, window_bounds = array<i64: 8, 128>}, {pipeline_mode = #tpu.pipeline_mode<synchronous>, transform_indices = @transform_2, window_bounds = array<i64: 4, 128>}, {pipeline_mode = #tpu.pipeline_mode<synchronous>, transform_indices = @transform_3, window_bounds = array<i64: 1, 128>}, {pipeline_mode = #tpu.pipeline_mode<synchronous>, transform_indices = @transform_4, window_bounds = array<i64: 128, 128>}, {pipeline_mode = #tpu.pipeline_mode<synchronous>, transform_indices = @transform_5, window_bounds = array<i64: 128, 128>}, {pipeline_mode = #tpu.pipeline_mode<synchronous>, transform_indices = @transform_6, window_bounds = array<i64: 1, 128>}, {pipeline_mode = #tpu.pipeline_mode<synchronous>, transform_indices = @transform_7, window_bounds = array<i64: 8, 128>}, {pipeline_mode = #tpu.pipeline_mode<synchronous>, transform_indices = @transform_8, window_bounds = array<i64: 8, 128>}]} {
    %c0_i32 = arith.constant 0 : i32
    %0 = arith.cmpi eq, %arg0, %c0_i32 : i32
    %1 = arith.extui %0 : i1 to i32
    %c0_i32_0 = arith.constant 0 : i32
    %2 = arith.cmpi ne, %1, %c0_i32_0 : i32
    scf.if %2 {
      %c0_63 = arith.constant 0 : index
      %c0_64 = arith.constant 0 : index
      %87 = vector.load %arg2[%c0_63, %c0_64] : memref<8x128xf32, #tpu.memory_space<vmem>>, vector<8x128xf32>
      %c0_65 = arith.constant 0 : index
      %c0_66 = arith.constant 0 : index
      %88 = vector.load %arg11[%c0_65, %c0_66] : memref<8x128xf32, #tpu.memory_space<vmem>>, vector<8x128xf32>
      tpu.vector_store %arg11[%c0_65, %c0_66], %87 {strides = array<i32>} : memref<8x128xf32, #tpu.memory_space<vmem>>, vector<8x128xf32>,
    } else {
    }
    %c0 = arith.constant 0 : index
    %c0_1 = arith.constant 0 : index
    %3 = vector.load %arg1[%c0, %c0_1] : memref<64x4xf32, #tpu.memory_space<vmem>>, vector<64x4xf32>
    %c0_2 = arith.constant 0 : index
    %c0_3 = arith.constant 0 : index
    %4 = vector.load %arg3[%c0_2, %c0_3] : memref<4x128xf32, #tpu.memory_space<vmem>>, vector<4x128xf32>
    %cst = arith.constant dense<0.000000e+00> : vector<64x128xf32>
    %5 = tpu.matmul %3, %4, %cst {dimension_numbers = #tpu.dot_dimension_numbers<[1], [0], [0], [1], [0, 0, 1, 1], [], []>} : vector<64x4xf32>, vector<4x128xf32>, vector<64x128xf32> -> vector<64x128xf32>
    %c0_4 = arith.constant 0 : index
    %c0_5 = arith.constant 0 : index
    %6 = vector.load %arg4[%c0_4, %c0_5] : memref<1x128xf32, #tpu.memory_space<vmem>>, vector<1x128xf32>
    %7 = vector.broadcast %6 : vector<1x128xf32> to vector<64x128xf32>
    %8 = arith.addf %5, %7 : vector<64x128xf32>
    %c0_6 = arith.constant 0 : index
    %c0_7 = arith.constant 0 : index
    %9 = vector.load %arg10[%c0_6, %c0_7] : memref<64x128xf32, #tpu.memory_space<vmem>>, vector<64x128xf32>
    tpu.vector_store %arg10[%c0_6, %c0_7], %8 {strides = array<i32>} : memref<64x128xf32, #tpu.memory_space<vmem>>, vector<64x128xf32>,
    %c0_8 = arith.constant 0 : index
    %c0_9 = arith.constant 0 : index
    %10 = vector.load %arg11[%c0_8, %c0_9] : memref<8x128xf32, #tpu.memory_space<vmem>>, vector<8x128xf32>
    %c0_i32_10 = arith.constant 0 : i32
    %c8_i32 = arith.constant 8 : i32
    %11 = arith.muli %c0_i32_10, %c8_i32 : i32
    %12 = tpu.assume_multiple %11, 8 : i32
    %13 = arith.index_cast %12 : i32 to index
    %c0_11 = arith.constant 0 : index
    %14 = vector.load %arg10[%13, %c0_11] : memref<64x128xf32, #tpu.memory_space<vmem>>, vector<8x128xf32>
    %c0_12 = arith.constant 0 : index
    %c0_13 = arith.constant 0 : index
    %15 = vector.load %arg5[%c0_12, %c0_13] : memref<128x128xf32, #tpu.memory_space<vmem>>, vector<128x128xf32>
    %cst_14 = arith.constant dense<0.000000e+00> : vector<8x128xf32>
    %16 = tpu.matmul %10, %15, %cst_14 {dimension_numbers = #tpu.dot_dimension_numbers<[1], [0], [0], [1], [0, 0, 1, 1], [], []>} : vector<8x128xf32>, vector<128x128xf32>, vector<8x128xf32> -> vector<8x128xf32>
    %17 = arith.addf %14, %16 : vector<8x128xf32>
    %cst_15 = arith.constant 0.000000e+00 : f32
    %18 = vector.broadcast %cst_15 : f32 to vector<8x128xf32>
    %19 = arith.maximumf %17, %18 : vector<8x128xf32>
    %c1_i32 = arith.constant 1 : i32
    %c8_i32_16 = arith.constant 8 : i32
    %20 = arith.muli %c1_i32, %c8_i32_16 : i32
    %21 = tpu.assume_multiple %20, 8 : i32
    %22 = arith.index_cast %21 : i32 to index
    %c0_17 = arith.constant 0 : index
    %23 = vector.load %arg10[%22, %c0_17] : memref<64x128xf32, #tpu.memory_space<vmem>>, vector<8x128xf32>
    %c0_18 = arith.constant 0 : index
    %c0_19 = arith.constant 0 : index
    %24 = vector.load %arg5[%c0_18, %c0_19] : memref<128x128xf32, #tpu.memory_space<vmem>>, vector<128x128xf32>
    %cst_20 = arith.constant dense<0.000000e+00> : vector<8x128xf32>
    %25 = tpu.matmul %19, %24, %cst_20 {dimension_numbers = #tpu.dot_dimension_numbers<[1], [0], [0], [1], [0, 0, 1, 1], [], []>} : vector<8x128xf32>, vector<128x128xf32>, vector<8x128xf32> -> vector<8x128xf32>
    %26 = arith.addf %23, %25 : vector<8x128xf32>
    %cst_21 = arith.constant 0.000000e+00 : f32
    %27 = vector.broadcast %cst_21 : f32 to vector<8x128xf32>
    %28 = arith.maximumf %26, %27 : vector<8x128xf32>
    %c2_i32 = arith.constant 2 : i32
    %c8_i32_22 = arith.constant 8 : i32
    %29 = arith.muli %c2_i32, %c8_i32_22 : i32
    %30 = tpu.assume_multiple %29, 8 : i32
    %31 = arith.index_cast %30 : i32 to index
    %c0_23 = arith.constant 0 : index
    %32 = vector.load %arg10[%31, %c0_23] : memref<64x128xf32, #tpu.memory_space<vmem>>, vector<8x128xf32>
    %c0_24 = arith.constant 0 : index
    %c0_25 = arith.constant 0 : index
    %33 = vector.load %arg5[%c0_24, %c0_25] : memref<128x128xf32, #tpu.memory_space<vmem>>, vector<128x128xf32>
    %cst_26 = arith.constant dense<0.000000e+00> : vector<8x128xf32>
    %34 = tpu.matmul %28, %33, %cst_26 {dimension_numbers = #tpu.dot_dimension_numbers<[1], [0], [0], [1], [0, 0, 1, 1], [], []>} : vector<8x128xf32>, vector<128x128xf32>, vector<8x128xf32> -> vector<8x128xf32>
    %35 = arith.addf %32, %34 : vector<8x128xf32>
    %cst_27 = arith.constant 0.000000e+00 : f32
    %36 = vector.broadcast %cst_27 : f32 to vector<8x128xf32>
    %37 = arith.maximumf %35, %36 : vector<8x128xf32>
    %c3_i32 = arith.constant 3 : i32
    %c8_i32_28 = arith.constant 8 : i32
    %38 = arith.muli %c3_i32, %c8_i32_28 : i32
    %39 = tpu.assume_multiple %38, 8 : i32
    %40 = arith.index_cast %39 : i32 to index
    %c0_29 = arith.constant 0 : index
    %41 = vector.load %arg10[%40, %c0_29] : memref<64x128xf32, #tpu.memory_space<vmem>>, vector<8x128xf32>
    %c0_30 = arith.constant 0 : index
    %c0_31 = arith.constant 0 : index
    %42 = vector.load %arg5[%c0_30, %c0_31] : memref<128x128xf32, #tpu.memory_space<vmem>>, vector<128x128xf32>
    %cst_32 = arith.constant dense<0.000000e+00> : vector<8x128xf32>
    %43 = tpu.matmul %37, %42, %cst_32 {dimension_numbers = #tpu.dot_dimension_numbers<[1], [0], [0], [1], [0, 0, 1, 1], [], []>} : vector<8x128xf32>, vector<128x128xf32>, vector<8x128xf32> -> vector<8x128xf32>
    %44 = arith.addf %41, %43 : vector<8x128xf32>
    %cst_33 = arith.constant 0.000000e+00 : f32
    %45 = vector.broadcast %cst_33 : f32 to vector<8x128xf32>
    %46 = arith.maximumf %44, %45 : vector<8x128xf32>
    %c4_i32 = arith.constant 4 : i32
    %c8_i32_34 = arith.constant 8 : i32
    %47 = arith.muli %c4_i32, %c8_i32_34 : i32
    %48 = tpu.assume_multiple %47, 8 : i32
    %49 = arith.index_cast %48 : i32 to index
    %c0_35 = arith.constant 0 : index
    %50 = vector.load %arg10[%49, %c0_35] : memref<64x128xf32, #tpu.memory_space<vmem>>, vector<8x128xf32>
    %c0_36 = arith.constant 0 : index
    %c0_37 = arith.constant 0 : index
    %51 = vector.load %arg5[%c0_36, %c0_37] : memref<128x128xf32, #tpu.memory_space<vmem>>, vector<128x128xf32>
    %cst_38 = arith.constant dense<0.000000e+00> : vector<8x128xf32>
    %52 = tpu.matmul %46, %51, %cst_38 {dimension_numbers = #tpu.dot_dimension_numbers<[1], [0], [0], [1], [0, 0, 1, 1], [], []>} : vector<8x128xf32>, vector<128x128xf32>, vector<8x128xf32> -> vector<8x128xf32>
    %53 = arith.addf %50, %52 : vector<8x128xf32>
    %cst_39 = arith.constant 0.000000e+00 : f32
    %54 = vector.broadcast %cst_39 : f32 to vector<8x128xf32>
    %55 = arith.maximumf %53, %54 : vector<8x128xf32>
    %c5_i32 = arith.constant 5 : i32
    %c8_i32_40 = arith.constant 8 : i32
    %56 = arith.muli %c5_i32, %c8_i32_40 : i32
    %57 = tpu.assume_multiple %56, 8 : i32
    %58 = arith.index_cast %57 : i32 to index
    %c0_41 = arith.constant 0 : index
    %59 = vector.load %arg10[%58, %c0_41] : memref<64x128xf32, #tpu.memory_space<vmem>>, vector<8x128xf32>
    %c0_42 = arith.constant 0 : index
    %c0_43 = arith.constant 0 : index
    %60 = vector.load %arg5[%c0_42, %c0_43] : memref<128x128xf32, #tpu.memory_space<vmem>>, vector<128x128xf32>
    %cst_44 = arith.constant dense<0.000000e+00> : vector<8x128xf32>
    %61 = tpu.matmul %55, %60, %cst_44 {dimension_numbers = #tpu.dot_dimension_numbers<[1], [0], [0], [1], [0, 0, 1, 1], [], []>} : vector<8x128xf32>, vector<128x128xf32>, vector<8x128xf32> -> vector<8x128xf32>
    %62 = arith.addf %59, %61 : vector<8x128xf32>
    %cst_45 = arith.constant 0.000000e+00 : f32
    %63 = vector.broadcast %cst_45 : f32 to vector<8x128xf32>
    %64 = arith.maximumf %62, %63 : vector<8x128xf32>
    %c6_i32 = arith.constant 6 : i32
    %c8_i32_46 = arith.constant 8 : i32
    %65 = arith.muli %c6_i32, %c8_i32_46 : i32
    %66 = tpu.assume_multiple %65, 8 : i32
    %67 = arith.index_cast %66 : i32 to index
    %c0_47 = arith.constant 0 : index
    %68 = vector.load %arg10[%67, %c0_47] : memref<64x128xf32, #tpu.memory_space<vmem>>, vector<8x128xf32>
    %c0_48 = arith.constant 0 : index
    %c0_49 = arith.constant 0 : index
    %69 = vector.load %arg5[%c0_48, %c0_49] : memref<128x128xf32, #tpu.memory_space<vmem>>, vector<128x128xf32>
    %cst_50 = arith.constant dense<0.000000e+00> : vector<8x128xf32>
    %70 = tpu.matmul %64, %69, %cst_50 {dimension_numbers = #tpu.dot_dimension_numbers<[1], [0], [0], [1], [0, 0, 1, 1], [], []>} : vector<8x128xf32>, vector<128x128xf32>, vector<8x128xf32> -> vector<8x128xf32>
    %71 = arith.addf %68, %70 : vector<8x128xf32>
    %cst_51 = arith.constant 0.000000e+00 : f32
    %72 = vector.broadcast %cst_51 : f32 to vector<8x128xf32>
    %73 = arith.maximumf %71, %72 : vector<8x128xf32>
    %c7_i32 = arith.constant 7 : i32
    %c8_i32_52 = arith.constant 8 : i32
    %74 = arith.muli %c7_i32, %c8_i32_52 : i32
    %75 = tpu.assume_multiple %74, 8 : i32
    %76 = arith.index_cast %75 : i32 to index
    %c0_53 = arith.constant 0 : index
    %77 = vector.load %arg10[%76, %c0_53] : memref<64x128xf32, #tpu.memory_space<vmem>>, vector<8x128xf32>
    %c0_54 = arith.constant 0 : index
    %c0_55 = arith.constant 0 : index
    %78 = vector.load %arg5[%c0_54, %c0_55] : memref<128x128xf32, #tpu.memory_space<vmem>>, vector<128x128xf32>
    %cst_56 = arith.constant dense<0.000000e+00> : vector<8x128xf32>
    %79 = tpu.matmul %73, %78, %cst_56 {dimension_numbers = #tpu.dot_dimension_numbers<[1], [0], [0], [1], [0, 0, 1, 1], [], []>} : vector<8x128xf32>, vector<128x128xf32>, vector<8x128xf32> -> vector<8x128xf32>
    %80 = arith.addf %77, %79 : vector<8x128xf32>
    %cst_57 = arith.constant 0.000000e+00 : f32
    %81 = vector.broadcast %cst_57 : f32 to vector<8x128xf32>
    %82 = arith.maximumf %80, %81 : vector<8x128xf32>
    %c8_i32_58 = arith.constant 8 : i32
    %c0_59 = arith.constant 0 : index
    %c0_60 = arith.constant 0 : index
    %83 = vector.load %arg11[%c0_59, %c0_60] : memref<8x128xf32, #tpu.memory_space<vmem>>, vector<8x128xf32>
    tpu.vector_store %arg11[%c0_59, %c0_60], %82 {strides = array<i32>} : memref<8x128xf32, #tpu.memory_space<vmem>>, vector<8x128xf32>,
    %c0_i32_61 = arith.constant 0 : i32
    %84 = arith.cmpi eq, %arg0, %c0_i32_61 : i32
    %85 = arith.extui %84 : i1 to i32
    %c0_i32_62 = arith.constant 0 : i32
    %86 = arith.cmpi ne, %85, %c0_i32_62 : i32
    scf.if %86 {
      %c0_63 = arith.constant 0 : index
      %c0_64 = arith.constant 0 : index
      %87 = vector.load %arg11[%c0_63, %c0_64] : memref<8x128xf32, #tpu.memory_space<vmem>>, vector<8x128xf32>
      %c0_65 = arith.constant 0 : index
      %c0_66 = arith.constant 0 : index
      %88 = vector.load %arg9[%c0_65, %c0_66] : memref<8x128xf32, #tpu.memory_space<vmem>>, vector<8x128xf32>
      tpu.vector_store %arg9[%c0_65, %c0_66], %87 {strides = array<i32>} : memref<8x128xf32, #tpu.memory_space<vmem>>, vector<8x128xf32>,
      %c0_67 = arith.constant 0 : index
      %c0_68 = arith.constant 0 : index
      %89 = vector.load %arg6[%c0_67, %c0_68] : memref<128x128xf32, #tpu.memory_space<vmem>>, vector<128x128xf32>
      %cst_69 = arith.constant dense<0.000000e+00> : vector<8x128xf32>
      %90 = tpu.matmul %87, %89, %cst_69 {dimension_numbers = #tpu.dot_dimension_numbers<[1], [0], [0], [1], [0, 0, 1, 1], [], []>} : vector<8x128xf32>, vector<128x128xf32>, vector<8x128xf32> -> vector<8x128xf32>
      %c0_70 = arith.constant 0 : index
      %c0_71 = arith.constant 0 : index
      %91 = vector.load %arg7[%c0_70, %c0_71] : memref<1x128xf32, #tpu.memory_space<vmem>>, vector<1x128xf32>
      %92 = vector.broadcast %91 : vector<1x128xf32> to vector<8x128xf32>
      %93 = arith.addf %90, %92 : vector<8x128xf32>
      %c0_72 = arith.constant 0 : index
      %c0_73 = arith.constant 0 : index
      %94 = vector.load %arg8[%c0_72, %c0_73] : memref<8x128xf32, #tpu.memory_space<vmem>>, vector<8x128xf32>
      tpu.vector_store %arg8[%c0_72, %c0_73], %93 {strides = array<i32>} : memref<8x128xf32, #tpu.memory_space<vmem>>, vector<8x128xf32>,
    } else {
    }
    return
  }
  func.func @transform_0(%arg0: i32) -> (i32, i32) {
    %c0_i32 = arith.constant 0 : i32
    %c0_i32_0 = arith.constant 0 : i32
    return %arg0, %c0_i32 : i32, i32
  }
  func.func @transform_1(%arg0: i32) -> (i32, i32) {
    %c0_i32 = arith.constant 0 : i32
    %c0_i32_0 = arith.constant 0 : i32
    %c0_i32_1 = arith.constant 0 : i32
    return %c0_i32, %c0_i32_0 : i32, i32
  }
  func.func @transform_2(%arg0: i32) -> (i32, i32) {
    %c0_i32 = arith.constant 0 : i32
    %c0_i32_0 = arith.constant 0 : i32
    %c0_i32_1 = arith.constant 0 : i32
    return %c0_i32, %c0_i32_0 : i32, i32
  }
  func.func @transform_3(%arg0: i32) -> (i32, i32) {
    %c0_i32 = arith.constant 0 : i32
    %c0_i32_0 = arith.constant 0 : i32
    %c0_i32_1 = arith.constant 0 : i32
    return %c0_i32, %c0_i32_0 : i32, i32
  }
  func.func @transform_4(%arg0: i32) -> (i32, i32) {
    %c0_i32 = arith.constant 0 : i32
    %c0_i32_0 = arith.constant 0 : i32
    %c0_i32_1 = arith.constant 0 : i32
    return %c0_i32, %c0_i32_0 : i32, i32
  }
  func.func @transform_5(%arg0: i32) -> (i32, i32) {
    %c0_i32 = arith.constant 0 : i32
    %c0_i32_0 = arith.constant 0 : i32
    %c0_i32_1 = arith.constant 0 : i32
    return %c0_i32, %c0_i32_0 : i32, i32
  }
  func.func @transform_6(%arg0: i32) -> (i32, i32) {
    %c0_i32 = arith.constant 0 : i32
    %c0_i32_0 = arith.constant 0 : i32
    %c0_i32_1 = arith.constant 0 : i32
    return %c0_i32, %c0_i32_0 : i32, i32
  }
  func.func @transform_7(%arg0: i32) -> (i32, i32) {
    %c0_i32 = arith.constant 0 : i32
    %c0_i32_0 = arith.constant 0 : i32
    %c0_i32_1 = arith.constant 0 : i32
    return %c0_i32, %c0_i32_0 : i32, i32
  }
  func.func @transform_8(%arg0: i32) -> (i32, i32) {
    %c0_i32 = arith.constant 0 : i32
    %c0_i32_0 = arith.constant 0 : i32
    %c0_i32_1 = arith.constant 0 : i32
    return %c0_i32, %c0_i32_0 : i32, i32
  }
}

</mosaic_0001>

<llo_original>
// kernel: generic_rnn_forward.1
$region0: #{generic_rnn_forward.1}
  #allocation0 [shape = 'u32[]', space=smem, size = 0x4, offset = 0x4, fixed_abs, tag = 'smem constant byte address 0x4 - core index']
  #allocation1 [shape = 'u32[144,128]{1,0:T(1,128)}', space=vmem, size = 0x12000, scoped, tag = 'internal scratch']
  #allocation2 [shape = 'f32[64,128]{1,0:T(8,128)}', space=vmem, size = 0x8000, scoped, tag = 'scratch operand']
  #allocation3 [shape = 'f32[8,128]{1,0:T(8,128)}', space=vmem, size = 0x1000, scoped, tag = 'scratch operand']
  %s0 = inlined_call_operand.vmem [shape: f32[64,4], index: 0, kind: input, shape index: {}]
  %s1 = inlined_call_operand.vmem [shape: f32[8,128], index: 1, kind: input, shape index: {}]
  %s2 = inlined_call_operand.vmem [shape: f32[4,128], index: 2, kind: input, shape index: {}]
  %s3 = inlined_call_operand.vmem [shape: f32[1,128], index: 3, kind: input, shape index: {}]
  %s4 = inlined_call_operand.vmem [shape: f32[128,128], index: 4, kind: input, shape index: {}]
  %s5 = inlined_call_operand.vmem [shape: f32[128,128], index: 5, kind: input, shape index: {}]
  %s6 = inlined_call_operand.vmem [shape: f32[1,128], index: 6, kind: input, shape index: {}]
  %s7 = inlined_call_operand.vmem [shape: f32[8,128], index: 7, kind: output, shape index: {0}]
  %s8 = inlined_call_operand.vmem [shape: f32[8,128], index: 8, kind: output, shape index: {1}]
  %9 = xla_tuple %s7, %s8
  %s10 = sld [smem:[#allocation0]]
  $region54: #{generic_rnn_forward.1} parent=0
    _
  %s12 = ssub.s32 1, %s10
  %s13 = scalar_select 0, %s12, %s10
  // Predicated region
  $region2: #{generic_rnn_forward.1} parent=0 // pred_check
    _
  $region3: #{generic_rnn_forward.1} parent=0 // pred_check_branch
    %15 = sbr.rel (0) target = $region5
  $region4: #{generic_rnn_forward.1} parent=0 // pred_region
    _
  $region5: #{generic_rnn_forward.1} parent=0 // pred_fallthru
    _
  // Predicated region
  $region6: #{generic_rnn_forward.1} parent=0 // pred_check
    _
  $region7: #{generic_rnn_forward.1} parent=0 // pred_check_branch
    %17 = sbr.rel (0) target = $region9
  $region8: #{generic_rnn_forward.1} parent=0 // pred_region
    _
  $region9: #{generic_rnn_forward.1} parent=0 // pred_fallthru
    _
  // Predicated region
  $region10: #{generic_rnn_forward.1} parent=0 // pred_check
    _
  $region11: #{generic_rnn_forward.1} parent=0 // pred_check_branch
    %19 = sbr.rel (0) target = $region13
  $region12: #{generic_rnn_forward.1} parent=0 // pred_region
    _
  $region13: #{generic_rnn_forward.1} parent=0 // pred_fallthru
    _
  // Predicated region
  $region14: #{generic_rnn_forward.1} parent=0 // pred_check
    _
  $region15: #{generic_rnn_forward.1} parent=0 // pred_check_branch
    %21 = sbr.rel (0) target = $region17
  $region16: #{generic_rnn_forward.1} parent=0 // pred_region
    _
  $region17: #{generic_rnn_forward.1} parent=0 // pred_fallthru
    _
  // Predicated region
  $region18: #{generic_rnn_forward.1} parent=0 // pred_check
    _
  $region19: #{generic_rnn_forward.1} parent=0 // pred_check_branch
    %23 = sbr.rel (0) target = $region21
  $region20: #{generic_rnn_forward.1} parent=0 // pred_region
    _
  $region21: #{generic_rnn_forward.1} parent=0 // pred_fallthru
    _
  // Predicated region
  $region22: #{generic_rnn_forward.1} parent=0 // pred_check
    _
  $region23: #{generic_rnn_forward.1} parent=0 // pred_check_branch
    %25 = sbr.rel (0) target = $region25
  $region24: #{generic_rnn_forward.1} parent=0 // pred_region
    _
  $region25: #{generic_rnn_forward.1} parent=0 // pred_fallthru
    _
  // Predicated region
  $region26: #{generic_rnn_forward.1} parent=0 // pred_check
    _
  $region27: #{generic_rnn_forward.1} parent=0 // pred_check_branch
    %27 = sbr.rel (0) target = $region29
  $region28: #{generic_rnn_forward.1} parent=0 // pred_region
    _
  $region29: #{generic_rnn_forward.1} parent=0 // pred_fallthru
    _
  %p28 = scmp.eq.s32.totalorder 0, 0
  // Predicated region
  $region30: #{generic_rnn_forward.1} parent=0 // pred_check
    %p29 = pneg %p28
  $region31: #{generic_rnn_forward.1} parent=0 // pred_check_branch
    %31 = sbr.rel (%p29) target = $region33
  $region32: #{generic_rnn_forward.1} parent=0 // pred_region
    %v32 = vld [vmem:[%s1] sm:$0xff]
    %33 = vst [vmem:[#allocation3] sm:$0xff] %v32
  $region33: #{generic_rnn_forward.1} parent=0 // pred_fallthru
    _
  %v34 = vld [vmem:[%s0] sm:$0xff]
  %v35 = vld [vmem:[%s0 + $0x8] sm:$0xff]
  %v36 = vld [vmem:[%s0 + $0x10] sm:$0xff]
  %v37 = vld [vmem:[%s0 + $0x18] sm:$0xff]
  %v38 = vld [vmem:[%s0 + $0x20] sm:$0xff]
  %v39 = vld [vmem:[%s0 + $0x28] sm:$0xff]
  %v40 = vld [vmem:[%s0 + $0x30] sm:$0xff]
  %v41 = vld [vmem:[%s0 + $0x38] sm:$0xff]
  %v42 = vld [vmem:[%s2] sm:$0xf]
  %v43 = vld [vmem:[%s3] sm:$0x1]
  %v45 = vlaneseq
  %v46 = vshrl.u32 %v45, 7
  %v47 = vsub.s32 0, %v46
  %v48 = vrot.slane %v43, %v47
  %vm50 = vcmask 31744
  %v52 = vsel %vm50, %v34, 0
  %v55 = vsel %vm50, %v35, 0
  %v58 = vsel %vm50, %v36, 0
  %v61 = vsel %vm50, %v37, 0
  %v64 = vsel %vm50, %v38, 0
  %v67 = vsel %vm50, %v39, 0
  %v70 = vsel %vm50, %v40, 0
  %v73 = vsel %vm50, %v41, 0
  %vm75 = vcmask 1043456
  %v77 = vsel %vm75, %v42, 0
  %79 = vmatprep.subr.mxu0 0.0
  %80 = vmatpush1.msra.mxu0 %v77
  %81 = vmatprep.subr.mxu0 0.0
  %82 = vmatpush1.msra.mxu0 0.0
  %83 = vmatprep.subr.mxu0 0.0
  %84 = vmatpush1.msra.mxu0 0.0
  %85 = vmatprep.subr.mxu0 0.0
  %86 = vmatpush1.msra.mxu0 0.0
  %87 = vmatprep.subr.mxu0 0.0
  %88 = vmatpush1.msra.mxu0 0.0
  %89 = vmatprep.subr.mxu0 0.0
  %90 = vmatpush1.msra.mxu0 0.0
  %91 = vmatprep.subr.mxu0 0.0
  %92 = vmatpush1.msra.mxu0 0.0
  %93 = vmatprep.subr.mxu0 0.0
  %94 = vmatpush1.msra.mxu0 0.0
  %95 = vmatprep.subr.mxu0 0.0
  %96 = vmatpush1.msra.mxu0 0.0
  %97 = vmatprep.subr.mxu0 0.0
  %98 = vmatpush1.msra.mxu0 0.0
  %99 = vmatprep.subr.mxu0 0.0
  %100 = vmatpush1.msra.mxu0 0.0
  %101 = vmatprep.subr.mxu0 0.0
  %102 = vmatpush1.msra.mxu0 0.0
  %103 = vmatprep.subr.mxu0 0.0
  %104 = vmatpush1.msra.mxu0 0.0
  %105 = vmatprep.subr.mxu0 0.0
  %106 = vmatpush1.msra.mxu0 0.0
  %107 = vmatprep.subr.mxu0 0.0
  %108 = vmatpush1.msra.mxu0 0.0
  %109 = vmatprep.subr.mxu0 0.0
  %110 = vmatpush1.msra.mxu0 0.0
  %111 = vmatprep.subr.mxu0 0.0
  %112 = vmatpush1.msra.mxu0 0.0
  %113 = vmatprep.subr.mxu0 0.0
  %114 = vmatpush1.msra.mxu0 0.0
  %115 = vmatprep.subr.mxu0 0.0
  %116 = vmatpush1.msra.mxu0 0.0
  %117 = vmatprep.subr.mxu0 0.0
  %118 = vmatpush1.msra.mxu0 0.0
  %119 = vmatprep.subr.mxu0 0.0
  %120 = vmatpush1.msra.mxu0 0.0
  %121 = vmatprep.subr.mxu0 0.0
  %122 = vmatpush1.msra.mxu0 0.0
  %123 = vmatprep.subr.mxu0 0.0
  %124 = vmatpush1.msra.mxu0 0.0
  %125 = vmatprep.subr.mxu0 0.0
  %126 = vmatpush1.msra.mxu0 0.0
  %127 = vmatprep.subr.mxu0 0.0
  %128 = vmatpush1.msra.mxu0 0.0
  %129 = vmatprep.subr.mxu0 0.0
  %130 = vmatpush1.msra.mxu0 0.0
  %131 = vmatprep.subr.mxu0 0.0
  %132 = vmatpush1.msra.mxu0 0.0
  %133 = vmatprep.subr.mxu0 0.0
  %134 = vmatpush1.msra.mxu0 0.0
  %135 = vmatprep.subr.mxu0 0.0
  %136 = vmatpush1.msra.mxu0 0.0
  %137 = vmatprep.subr.mxu0 0.0
  %138 = vmatpush1.msra.mxu0 0.0
  %139 = vmatprep.subr.mxu0 0.0
  %140 = vmatpush1.msra.mxu0 0.0
  %141 = vmatprep.subr.mxu0 0.0
  %142 = vmatpush1.msra.mxu0 0.0
  %143 = vmatprep.mubr.f32.mxu0 0.0
  %144 = vmatmul.mubr.f32.gmra.mrb[0].mxu0 %v52
  %v145 = vpop.f32.mrb[0].mxu0
  %v146 = vadd.f32 %v48, %v145
  %v147 = vpop.f32.mrb[0].mxu0
  %148 = vmatprep.mubr.f32.mxu0 0.0
  %149 = vmatmul.mubr.f32.gmra.mrb[0].mxu0 %v55
  %v150 = vpop.f32.mrb[0].mxu0
  %v151 = vadd.f32 %v48, %v150
  %v152 = vpop.f32.mrb[0].mxu0
  %153 = vmatprep.mubr.f32.mxu0 0.0
  %154 = vmatmul.mubr.f32.gmra.mrb[0].mxu0 %v58
  %v155 = vpop.f32.mrb[0].mxu0
  %v156 = vadd.f32 %v48, %v155
  %v157 = vpop.f32.mrb[0].mxu0
  %158 = vmatprep.mubr.f32.mxu0 0.0
  %159 = vmatmul.mubr.f32.gmra.mrb[0].mxu0 %v61
  %v160 = vpop.f32.mrb[0].mxu0
  %v161 = vadd.f32 %v48, %v160
  %v162 = vpop.f32.mrb[0].mxu0
  %163 = vmatprep.mubr.f32.mxu0 0.0
  %164 = vmatmul.mubr.f32.gmra.mrb[0].mxu0 %v64
  %v165 = vpop.f32.mrb[0].mxu0
  %v166 = vadd.f32 %v48, %v165
  %v167 = vpop.f32.mrb[0].mxu0
  %168 = vmatprep.mubr.f32.mxu0 0.0
  %169 = vmatmul.mubr.f32.gmra.mrb[0].mxu0 %v67
  %v170 = vpop.f32.mrb[0].mxu0
  %v171 = vadd.f32 %v48, %v170
  %v172 = vpop.f32.mrb[0].mxu0
  %173 = vmatprep.mubr.f32.mxu0 0.0
  %174 = vmatmul.mubr.f32.gmra.mrb[0].mxu0 %v70
  %v175 = vpop.f32.mrb[0].mxu0
  %v176 = vadd.f32 %v48, %v175
  %v177 = vpop.f32.mrb[0].mxu0
  %178 = vmatprep.mubr.f32.mxu0 0.0
  %179 = vmatmul.mubr.f32.gmra.mrb[0].mxu0 %v73
  %v180 = vpop.f32.mrb[0].mxu0
  %v181 = vadd.f32 %v48, %v180
  %v182 = vpop.f32.mrb[0].mxu0
  %183 = vdwg.mxu0
  %184 = vst [vmem:[#allocation2] sm:$0xff] %v146
  %185 = vst [vmem:[#allocation2 + $0x8] sm:$0xff] %v151
  %186 = vst [vmem:[#allocation2 + $0x10] sm:$0xff] %v156
  %187 = vst [vmem:[#allocation2 + $0x18] sm:$0xff] %v161
  %188 = vst [vmem:[#allocation2 + $0x20] sm:$0xff] %v166
  %189 = vst [vmem:[#allocation2 + $0x28] sm:$0xff] %v171
  %190 = vst [vmem:[#allocation2 + $0x30] sm:$0xff] %v176
  %191 = vst [vmem:[#allocation2 + $0x38] sm:$0xff] %v181
  %v192 = vld [vmem:[#allocation3] sm:$0xff]
  %v193 = vld [vmem:[#allocation2] sm:$0xff]
  %v194 = vld [vmem:[%s4] sm:$0xff]
  %v195 = vld [vmem:[%s4 + $0x8] sm:$0xff]
  %v196 = vld [vmem:[%s4 + $0x10] sm:$0xff]
  %v197 = vld [vmem:[%s4 + $0x18] sm:$0xff]
  %v198 = vld [vmem:[%s4 + $0x20] sm:$0xff]
  %v199 = vld [vmem:[%s4 + $0x28] sm:$0xff]
  %v200 = vld [vmem:[%s4 + $0x30] sm:$0xff]
  %v201 = vld [vmem:[%s4 + $0x38] sm:$0xff]
  %v202 = vld [vmem:[%s4 + $0x40] sm:$0xff]
  %v203 = vld [vmem:[%s4 + $0x48] sm:$0xff]
  %v204 = vld [vmem:[%s4 + $0x50] sm:$0xff]
  %v205 = vld [vmem:[%s4 + $0x58] sm:$0xff]
  %v206 = vld [vmem:[%s4 + $0x60] sm:$0xff]
  %v207 = vld [vmem:[%s4 + $0x68] sm:$0xff]
  %v208 = vld [vmem:[%s4 + $0x70] sm:$0xff]
  %v209 = vld [vmem:[%s4 + $0x78] sm:$0xff]
  %210 = vmatprep.subr.mxu0 0.0
  %211 = vmatpush1.msra.mxu0 %v194
  %212 = vmatprep.subr.mxu0 0.0
  %213 = vmatpush1.msra.mxu0 %v195
  %214 = vmatprep.subr.mxu0 0.0
  %215 = vmatpush1.msra.mxu0 %v196
  %216 = vmatprep.subr.mxu0 0.0
  %217 = vmatpush1.msra.mxu0 %v197
  %218 = vmatprep.subr.mxu0 0.0
  %219 = vmatpush1.msra.mxu0 %v198
  %220 = vmatprep.subr.mxu0 0.0
  %221 = vmatpush1.msra.mxu0 %v199
  %222 = vmatprep.subr.mxu0 0.0
  %223 = vmatpush1.msra.mxu0 %v200
  %224 = vmatprep.subr.mxu0 0.0
  %225 = vmatpush1.msra.mxu0 %v201
  %226 = vmatprep.subr.mxu0 0.0
  %227 = vmatpush1.msra.mxu0 %v202
  %228 = vmatprep.subr.mxu0 0.0
  %229 = vmatpush1.msra.mxu0 %v203
  %230 = vmatprep.subr.mxu0 0.0
  %231 = vmatpush1.msra.mxu0 %v204
  %232 = vmatprep.subr.mxu0 0.0
  %233 = vmatpush1.msra.mxu0 %v205
  %234 = vmatprep.subr.mxu0 0.0
  %235 = vmatpush1.msra.mxu0 %v206
  %236 = vmatprep.subr.mxu0 0.0
  %237 = vmatpush1.msra.mxu0 %v207
  %238 = vmatprep.subr.mxu0 0.0
  %239 = vmatpush1.msra.mxu0 %v208
  %240 = vmatprep.subr.mxu0 0.0
  %241 = vmatpush1.msra.mxu0 %v209
  %242 = vmatprep.subr.mxu0 0.0
  %243 = vmatpush1.msra.mxu0 0.0
  %244 = vmatprep.subr.mxu0 0.0
  %245 = vmatpush1.msra.mxu0 0.0
  %246 = vmatprep.subr.mxu0 0.0
  %247 = vmatpush1.msra.mxu0 0.0
  %248 = vmatprep.subr.mxu0 0.0
  %249 = vmatpush1.msra.mxu0 0.0
  %250 = vmatprep.subr.mxu0 0.0
  %251 = vmatpush1.msra.mxu0 0.0
  %252 = vmatprep.subr.mxu0 0.0
  %253 = vmatpush1.msra.mxu0 0.0
  %254 = vmatprep.subr.mxu0 0.0
  %255 = vmatpush1.msra.mxu0 0.0
  %256 = vmatprep.subr.mxu0 0.0
  %257 = vmatpush1.msra.mxu0 0.0
  %258 = vmatprep.subr.mxu0 0.0
  %259 = vmatpush1.msra.mxu0 0.0
  %260 = vmatprep.subr.mxu0 0.0
  %261 = vmatpush1.msra.mxu0 0.0
  %262 = vmatprep.subr.mxu0 0.0
  %263 = vmatpush1.msra.mxu0 0.0
  %264 = vmatprep.subr.mxu0 0.0
  %265 = vmatpush1.msra.mxu0 0.0
  %266 = vmatprep.subr.mxu0 0.0
  %267 = vmatpush1.msra.mxu0 0.0
  %268 = vmatprep.subr.mxu0 0.0
  %269 = vmatpush1.msra.mxu0 0.0
  %270 = vmatprep.subr.mxu0 0.0
  %271 = vmatpush1.msra.mxu0 0.0
  %272 = vmatprep.subr.mxu0 0.0
  %273 = vmatpush1.msra.mxu0 0.0
  %274 = vmatprep.mubr.f32.mxu0 0.0
  %275 = vmatmul.mubr.f32.gmra.mrb[0].mxu0 %v192
  %v276 = vpop.f32.mrb[0].mxu0
  %v277 = vadd.f32 0.0, %v276
  %v278 = vpop.f32.mrb[0].mxu0
  %279 = vdwg.mxu0
  %v280 = vadd.f32 %v193, %v277
  %v281 = vmax.f32 %v280, 0.0
  %s282 = scalar_lea.vmem [#allocation2], 8
  %v283 = vld [vmem:[%s282] sm:$0xff]
  %284 = vmatprep.subr.mxu0 0.0
  %285 = vmatpush1.msra.mxu0 %v194
  %286 = vmatprep.subr.mxu0 0.0
  %287 = vmatpush1.msra.mxu0 %v195
  %288 = vmatprep.subr.mxu0 0.0
  %289 = vmatpush1.msra.mxu0 %v196
  %290 = vmatprep.subr.mxu0 0.0
  %291 = vmatpush1.msra.mxu0 %v197
  %292 = vmatprep.subr.mxu0 0.0
  %293 = vmatpush1.msra.mxu0 %v198
  %294 = vmatprep.subr.mxu0 0.0
  %295 = vmatpush1.msra.mxu0 %v199
  %296 = vmatprep.subr.mxu0 0.0
  %297 = vmatpush1.msra.mxu0 %v200
  %298 = vmatprep.subr.mxu0 0.0
  %299 = vmatpush1.msra.mxu0 %v201
  %300 = vmatprep.subr.mxu0 0.0
  %301 = vmatpush1.msra.mxu0 %v202
  %302 = vmatprep.subr.mxu0 0.0
  %303 = vmatpush1.msra.mxu0 %v203
  %304 = vmatprep.subr.mxu0 0.0
  %305 = vmatpush1.msra.mxu0 %v204
  %306 = vmatprep.subr.mxu0 0.0
  %307 = vmatpush1.msra.mxu0 %v205
  %308 = vmatprep.subr.mxu0 0.0
  %309 = vmatpush1.msra.mxu0 %v206
  %310 = vmatprep.subr.mxu0 0.0
  %311 = vmatpush1.msra.mxu0 %v207
  %312 = vmatprep.subr.mxu0 0.0
  %313 = vmatpush1.msra.mxu0 %v208
  %314 = vmatprep.subr.mxu0 0.0
  %315 = vmatpush1.msra.mxu0 %v209
  %316 = vmatprep.subr.mxu0 0.0
  %317 = vmatpush1.msra.mxu0 0.0
  %318 = vmatprep.subr.mxu0 0.0
  %319 = vmatpush1.msra.mxu0 0.0
  %320 = vmatprep.subr.mxu0 0.0
  %321 = vmatpush1.msra.mxu0 0.0
  %322 = vmatprep.subr.mxu0 0.0
  %323 = vmatpush1.msra.mxu0 0.0
  %324 = vmatprep.subr.mxu0 0.0
  %325 = vmatpush1.msra.mxu0 0.0
  %326 = vmatprep.subr.mxu0 0.0
  %327 = vmatpush1.msra.mxu0 0.0
  %328 = vmatprep.subr.mxu0 0.0
  %329 = vmatpush1.msra.mxu0 0.0
  %330 = vmatprep.subr.mxu0 0.0
  %331 = vmatpush1.msra.mxu0 0.0
  %332 = vmatprep.subr.mxu0 0.0
  %333 = vmatpush1.msra.mxu0 0.0
  %334 = vmatprep.subr.mxu0 0.0
  %335 = vmatpush1.msra.mxu0 0.0
  %336 = vmatprep.subr.mxu0 0.0
  %337 = vmatpush1.msra.mxu0 0.0
  %338 = vmatprep.subr.mxu0 0.0
  %339 = vmatpush1.msra.mxu0 0.0
  %340 = vmatprep.subr.mxu0 0.0
  %341 = vmatpush1.msra.mxu0 0.0
  %342 = vmatprep.subr.mxu0 0.0
  %343 = vmatpush1.msra.mxu0 0.0
  %344 = vmatprep.subr.mxu0 0.0
  %345 = vmatpush1.msra.mxu0 0.0
  %346 = vmatprep.subr.mxu0 0.0
  %347 = vmatpush1.msra.mxu0 0.0
  %348 = vmatprep.mubr.f32.mxu0 0.0
  %349 = vmatmul.mubr.f32.gmra.mrb[0].mxu0 %v281
  %v350 = vpop.f32.mrb[0].mxu0
  %v351 = vadd.f32 0.0, %v350
  %v352 = vpop.f32.mrb[0].mxu0
  %353 = vdwg.mxu0
  %v354 = vadd.f32 %v283, %v351
  %v355 = vmax.f32 %v354, 0.0
  %s356 = scalar_lea.vmem [#allocation2], 16
  %v357 = vld [vmem:[%s356] sm:$0xff]
  %358 = vmatprep.subr.mxu0 0.0
  %359 = vmatpush1.msra.mxu0 %v194
  %360 = vmatprep.subr.mxu0 0.0
  %361 = vmatpush1.msra.mxu0 %v195
  %362 = vmatprep.subr.mxu0 0.0
  %363 = vmatpush1.msra.mxu0 %v196
  %364 = vmatprep.subr.mxu0 0.0
  %365 = vmatpush1.msra.mxu0 %v197
  %366 = vmatprep.subr.mxu0 0.0
  %367 = vmatpush1.msra.mxu0 %v198
  %368 = vmatprep.subr.mxu0 0.0
  %369 = vmatpush1.msra.mxu0 %v199
  %370 = vmatprep.subr.mxu0 0.0
  %371 = vmatpush1.msra.mxu0 %v200
  %372 = vmatprep.subr.mxu0 0.0
  %373 = vmatpush1.msra.mxu0 %v201
  %374 = vmatprep.subr.mxu0 0.0
  %375 = vmatpush1.msra.mxu0 %v202
  %376 = vmatprep.subr.mxu0 0.0
  %377 = vmatpush1.msra.mxu0 %v203
  %378 = vmatprep.subr.mxu0 0.0
  %379 = vmatpush1.msra.mxu0 %v204
  %380 = vmatprep.subr.mxu0 0.0
  %381 = vmatpush1.msra.mxu0 %v205
  %382 = vmatprep.subr.mxu0 0.0
  %383 = vmatpush1.msra.mxu0 %v206
  %384 = vmatprep.subr.mxu0 0.0
  %385 = vmatpush1.msra.mxu0 %v207
  %386 = vmatprep.subr.mxu0 0.0
  %387 = vmatpush1.msra.mxu0 %v208
  %388 = vmatprep.subr.mxu0 0.0
  %389 = vmatpush1.msra.mxu0 %v209
  %390 = vmatprep.subr.mxu0 0.0
  %391 = vmatpush1.msra.mxu0 0.0
  %392 = vmatprep.subr.mxu0 0.0
  %393 = vmatpush1.msra.mxu0 0.0
  %394 = vmatprep.subr.mxu0 0.0
  %395 = vmatpush1.msra.mxu0 0.0
  %396 = vmatprep.subr.mxu0 0.0
  %397 = vmatpush1.msra.mxu0 0.0
  %398 = vmatprep.subr.mxu0 0.0
  %399 = vmatpush1.msra.mxu0 0.0
  %400 = vmatprep.subr.mxu0 0.0
  %401 = vmatpush1.msra.mxu0 0.0
  %402 = vmatprep.subr.mxu0 0.0
  %403 = vmatpush1.msra.mxu0 0.0
  %404 = vmatprep.subr.mxu0 0.0
  %405 = vmatpush1.msra.mxu0 0.0
  %406 = vmatprep.subr.mxu0 0.0
  %407 = vmatpush1.msra.mxu0 0.0
  %408 = vmatprep.subr.mxu0 0.0
  %409 = vmatpush1.msra.mxu0 0.0
  %410 = vmatprep.subr.mxu0 0.0
  %411 = vmatpush1.msra.mxu0 0.0
  %412 = vmatprep.subr.mxu0 0.0
  %413 = vmatpush1.msra.mxu0 0.0
  %414 = vmatprep.subr.mxu0 0.0
  %415 = vmatpush1.msra.mxu0 0.0
  %416 = vmatprep.subr.mxu0 0.0
  %417 = vmatpush1.msra.mxu0 0.0
  %418 = vmatprep.subr.mxu0 0.0
  %419 = vmatpush1.msra.mxu0 0.0
  %420 = vmatprep.subr.mxu0 0.0
  %421 = vmatpush1.msra.mxu0 0.0
  %422 = vmatprep.mubr.f32.mxu0 0.0
  %423 = vmatmul.mubr.f32.gmra.mrb[0].mxu0 %v355
  %v424 = vpop.f32.mrb[0].mxu0
  %v425 = vadd.f32 0.0, %v424
  %v426 = vpop.f32.mrb[0].mxu0
  %427 = vdwg.mxu0
  %v428 = vadd.f32 %v357, %v425
  %v429 = vmax.f32 %v428, 0.0
  %s430 = scalar_lea.vmem [#allocation2], 24
  %v431 = vld [vmem:[%s430] sm:$0xff]
  %432 = vmatprep.subr.mxu0 0.0
  %433 = vmatpush1.msra.mxu0 %v194
  %434 = vmatprep.subr.mxu0 0.0
  %435 = vmatpush1.msra.mxu0 %v195
  %436 = vmatprep.subr.mxu0 0.0
  %437 = vmatpush1.msra.mxu0 %v196
  %438 = vmatprep.subr.mxu0 0.0
  %439 = vmatpush1.msra.mxu0 %v197
  %440 = vmatprep.subr.mxu0 0.0
  %441 = vmatpush1.msra.mxu0 %v198
  %442 = vmatprep.subr.mxu0 0.0
  %443 = vmatpush1.msra.mxu0 %v199
  %444 = vmatprep.subr.mxu0 0.0
  %445 = vmatpush1.msra.mxu0 %v200
  %446 = vmatprep.subr.mxu0 0.0
  %447 = vmatpush1.msra.mxu0 %v201
  %448 = vmatprep.subr.mxu0 0.0
  %449 = vmatpush1.msra.mxu0 %v202
  %450 = vmatprep.subr.mxu0 0.0
  %451 = vmatpush1.msra.mxu0 %v203
  %452 = vmatprep.subr.mxu0 0.0
  %453 = vmatpush1.msra.mxu0 %v204
  %454 = vmatprep.subr.mxu0 0.0
  %455 = vmatpush1.msra.mxu0 %v205
  %456 = vmatprep.subr.mxu0 0.0
  %457 = vmatpush1.msra.mxu0 %v206
  %458 = vmatprep.subr.mxu0 0.0
  %459 = vmatpush1.msra.mxu0 %v207
  %460 = vmatprep.subr.mxu0 0.0
  %461 = vmatpush1.msra.mxu0 %v208
  %462 = vmatprep.subr.mxu0 0.0
  %463 = vmatpush1.msra.mxu0 %v209
  %464 = vmatprep.subr.mxu0 0.0
  %465 = vmatpush1.msra.mxu0 0.0
  %466 = vmatprep.subr.mxu0 0.0
  %467 = vmatpush1.msra.mxu0 0.0
  %468 = vmatprep.subr.mxu0 0.0
  %469 = vmatpush1.msra.mxu0 0.0
  %470 = vmatprep.subr.mxu0 0.0
  %471 = vmatpush1.msra.mxu0 0.0
  %472 = vmatprep.subr.mxu0 0.0
  %473 = vmatpush1.msra.mxu0 0.0
  %474 = vmatprep.subr.mxu0 0.0
  %475 = vmatpush1.msra.mxu0 0.0
  %476 = vmatprep.subr.mxu0 0.0
  %477 = vmatpush1.msra.mxu0 0.0
  %478 = vmatprep.subr.mxu0 0.0
  %479 = vmatpush1.msra.mxu0 0.0
  %480 = vmatprep.subr.mxu0 0.0
  %481 = vmatpush1.msra.mxu0 0.0
  %482 = vmatprep.subr.mxu0 0.0
  %483 = vmatpush1.msra.mxu0 0.0
  %484 = vmatprep.subr.mxu0 0.0
  %485 = vmatpush1.msra.mxu0 0.0
  %486 = vmatprep.subr.mxu0 0.0
  %487 = vmatpush1.msra.mxu0 0.0
  %488 = vmatprep.subr.mxu0 0.0
  %489 = vmatpush1.msra.mxu0 0.0
  %490 = vmatprep.subr.mxu0 0.0
  %491 = vmatpush1.msra.mxu0 0.0
  %492 = vmatprep.subr.mxu0 0.0
  %493 = vmatpush1.msra.mxu0 0.0
  %494 = vmatprep.subr.mxu0 0.0
  %495 = vmatpush1.msra.mxu0 0.0
  %496 = vmatprep.mubr.f32.mxu0 0.0
  %497 = vmatmul.mubr.f32.gmra.mrb[0].mxu0 %v429
  %v498 = vpop.f32.mrb[0].mxu0
  %v499 = vadd.f32 0.0, %v498
  %v500 = vpop.f32.mrb[0].mxu0
  %501 = vdwg.mxu0
  %v502 = vadd.f32 %v431, %v499
  %v503 = vmax.f32 %v502, 0.0
  %s504 = scalar_lea.vmem [#allocation2], 32
  %v505 = vld [vmem:[%s504] sm:$0xff]
  %506 = vmatprep.subr.mxu0 0.0
  %507 = vmatpush1.msra.mxu0 %v194
  %508 = vmatprep.subr.mxu0 0.0
  %509 = vmatpush1.msra.mxu0 %v195
  %510 = vmatprep.subr.mxu0 0.0
  %511 = vmatpush1.msra.mxu0 %v196
  %512 = vmatprep.subr.mxu0 0.0
  %513 = vmatpush1.msra.mxu0 %v197
  %514 = vmatprep.subr.mxu0 0.0
  %515 = vmatpush1.msra.mxu0 %v198
  %516 = vmatprep.subr.mxu0 0.0
  %517 = vmatpush1.msra.mxu0 %v199
  %518 = vmatprep.subr.mxu0 0.0
  %519 = vmatpush1.msra.mxu0 %v200
  %520 = vmatprep.subr.mxu0 0.0
  %521 = vmatpush1.msra.mxu0 %v201
  %522 = vmatprep.subr.mxu0 0.0
  %523 = vmatpush1.msra.mxu0 %v202
  %524 = vmatprep.subr.mxu0 0.0
  %525 = vmatpush1.msra.mxu0 %v203
  %526 = vmatprep.subr.mxu0 0.0
  %527 = vmatpush1.msra.mxu0 %v204
  %528 = vmatprep.subr.mxu0 0.0
  %529 = vmatpush1.msra.mxu0 %v205
  %530 = vmatprep.subr.mxu0 0.0
  %531 = vmatpush1.msra.mxu0 %v206
  %532 = vmatprep.subr.mxu0 0.0
  %533 = vmatpush1.msra.mxu0 %v207
  %534 = vmatprep.subr.mxu0 0.0
  %535 = vmatpush1.msra.mxu0 %v208
  %536 = vmatprep.subr.mxu0 0.0
  %537 = vmatpush1.msra.mxu0 %v209
  %538 = vmatprep.subr.mxu0 0.0
  %539 = vmatpush1.msra.mxu0 0.0
  %540 = vmatprep.subr.mxu0 0.0
  %541 = vmatpush1.msra.mxu0 0.0
  %542 = vmatprep.subr.mxu0 0.0
  %543 = vmatpush1.msra.mxu0 0.0
  %544 = vmatprep.subr.mxu0 0.0
  %545 = vmatpush1.msra.mxu0 0.0
  %546 = vmatprep.subr.mxu0 0.0
  %547 = vmatpush1.msra.mxu0 0.0
  %548 = vmatprep.subr.mxu0 0.0
  %549 = vmatpush1.msra.mxu0 0.0
  %550 = vmatprep.subr.mxu0 0.0
  %551 = vmatpush1.msra.mxu0 0.0
  %552 = vmatprep.subr.mxu0 0.0
  %553 = vmatpush1.msra.mxu0 0.0
  %554 = vmatprep.subr.mxu0 0.0
  %555 = vmatpush1.msra.mxu0 0.0
  %556 = vmatprep.subr.mxu0 0.0
  %557 = vmatpush1.msra.mxu0 0.0
  %558 = vmatprep.subr.mxu0 0.0
  %559 = vmatpush1.msra.mxu0 0.0
  %560 = vmatprep.subr.mxu0 0.0
  %561 = vmatpush1.msra.mxu0 0.0
  %562 = vmatprep.subr.mxu0 0.0
  %563 = vmatpush1.msra.mxu0 0.0
  %564 = vmatprep.subr.mxu0 0.0
  %565 = vmatpush1.msra.mxu0 0.0
  %566 = vmatprep.subr.mxu0 0.0
  %567 = vmatpush1.msra.mxu0 0.0
  %568 = vmatprep.subr.mxu0 0.0
  %569 = vmatpush1.msra.mxu0 0.0
  %570 = vmatprep.mubr.f32.mxu0 0.0
  %571 = vmatmul.mubr.f32.gmra.mrb[0].mxu0 %v503
  %v572 = vpop.f32.mrb[0].mxu0
  %v573 = vadd.f32 0.0, %v572
  %v574 = vpop.f32.mrb[0].mxu0
  %575 = vdwg.mxu0
  %v576 = vadd.f32 %v505, %v573
  %v577 = vmax.f32 %v576, 0.0
  %s578 = scalar_lea.vmem [#allocation2], 40
  %v579 = vld [vmem:[%s578] sm:$0xff]
  %580 = vmatprep.subr.mxu0 0.0
  %581 = vmatpush1.msra.mxu0 %v194
  %582 = vmatprep.subr.mxu0 0.0
  %583 = vmatpush1.msra.mxu0 %v195
  %584 = vmatprep.subr.mxu0 0.0
  %585 = vmatpush1.msra.mxu0 %v196
  %586 = vmatprep.subr.mxu0 0.0
  %587 = vmatpush1.msra.mxu0 %v197
  %588 = vmatprep.subr.mxu0 0.0
  %589 = vmatpush1.msra.mxu0 %v198
  %590 = vmatprep.subr.mxu0 0.0
  %591 = vmatpush1.msra.mxu0 %v199
  %592 = vmatprep.subr.mxu0 0.0
  %593 = vmatpush1.msra.mxu0 %v200
  %594 = vmatprep.subr.mxu0 0.0
  %595 = vmatpush1.msra.mxu0 %v201
  %596 = vmatprep.subr.mxu0 0.0
  %597 = vmatpush1.msra.mxu0 %v202
  %598 = vmatprep.subr.mxu0 0.0
  %599 = vmatpush1.msra.mxu0 %v203
  %600 = vmatprep.subr.mxu0 0.0
  %601 = vmatpush1.msra.mxu0 %v204
  %602 = vmatprep.subr.mxu0 0.0
  %603 = vmatpush1.msra.mxu0 %v205
  %604 = vmatprep.subr.mxu0 0.0
  %605 = vmatpush1.msra.mxu0 %v206
  %606 = vmatprep.subr.mxu0 0.0
  %607 = vmatpush1.msra.mxu0 %v207
  %608 = vmatprep.subr.mxu0 0.0
  %609 = vmatpush1.msra.mxu0 %v208
  %610 = vmatprep.subr.mxu0 0.0
  %611 = vmatpush1.msra.mxu0 %v209
  %612 = vmatprep.subr.mxu0 0.0
  %613 = vmatpush1.msra.mxu0 0.0
  %614 = vmatprep.subr.mxu0 0.0
  %615 = vmatpush1.msra.mxu0 0.0
  %616 = vmatprep.subr.mxu0 0.0
  %617 = vmatpush1.msra.mxu0 0.0
  %618 = vmatprep.subr.mxu0 0.0
  %619 = vmatpush1.msra.mxu0 0.0
  %620 = vmatprep.subr.mxu0 0.0
  %621 = vmatpush1.msra.mxu0 0.0
  %622 = vmatprep.subr.mxu0 0.0
  %623 = vmatpush1.msra.mxu0 0.0
  %624 = vmatprep.subr.mxu0 0.0
  %625 = vmatpush1.msra.mxu0 0.0
  %626 = vmatprep.subr.mxu0 0.0
  %627 = vmatpush1.msra.mxu0 0.0
  %628 = vmatprep.subr.mxu0 0.0
  %629 = vmatpush1.msra.mxu0 0.0
  %630 = vmatprep.subr.mxu0 0.0
  %631 = vmatpush1.msra.mxu0 0.0
  %632 = vmatprep.subr.mxu0 0.0
  %633 = vmatpush1.msra.mxu0 0.0
  %634 = vmatprep.subr.mxu0 0.0
  %635 = vmatpush1.msra.mxu0 0.0
  %636 = vmatprep.subr.mxu0 0.0
  %637 = vmatpush1.msra.mxu0 0.0
  %638 = vmatprep.subr.mxu0 0.0
  %639 = vmatpush1.msra.mxu0 0.0
  %640 = vmatprep.subr.mxu0 0.0
  %641 = vmatpush1.msra.mxu0 0.0
  %642 = vmatprep.subr.mxu0 0.0
  %643 = vmatpush1.msra.mxu0 0.0
  %644 = vmatprep.mubr.f32.mxu0 0.0
  %645 = vmatmul.mubr.f32.gmra.mrb[0].mxu0 %v577
  %v646 = vpop.f32.mrb[0].mxu0
  %v647 = vadd.f32 0.0, %v646
  %v648 = vpop.f32.mrb[0].mxu0
  %649 = vdwg.mxu0
  %v650 = vadd.f32 %v579, %v647
  %v651 = vmax.f32 %v650, 0.0
  %s652 = scalar_lea.vmem [#allocation2], 48
  %v653 = vld [vmem:[%s652] sm:$0xff]
  %654 = vmatprep.subr.mxu0 0.0
  %655 = vmatpush1.msra.mxu0 %v194
  %656 = vmatprep.subr.mxu0 0.0
  %657 = vmatpush1.msra.mxu0 %v195
  %658 = vmatprep.subr.mxu0 0.0
  %659 = vmatpush1.msra.mxu0 %v196
  %660 = vmatprep.subr.mxu0 0.0
  %661 = vmatpush1.msra.mxu0 %v197
  %662 = vmatprep.subr.mxu0 0.0
  %663 = vmatpush1.msra.mxu0 %v198
  %664 = vmatprep.subr.mxu0 0.0
  %665 = vmatpush1.msra.mxu0 %v199
  %666 = vmatprep.subr.mxu0 0.0
  %667 = vmatpush1.msra.mxu0 %v200
  %668 = vmatprep.subr.mxu0 0.0
  %669 = vmatpush1.msra.mxu0 %v201
  %670 = vmatprep.subr.mxu0 0.0
  %671 = vmatpush1.msra.mxu0 %v202
  %672 = vmatprep.subr.mxu0 0.0
  %673 = vmatpush1.msra.mxu0 %v203
  %674 = vmatprep.subr.mxu0 0.0
  %675 = vmatpush1.msra.mxu0 %v204
  %676 = vmatprep.subr.mxu0 0.0
  %677 = vmatpush1.msra.mxu0 %v205
  %678 = vmatprep.subr.mxu0 0.0
  %679 = vmatpush1.msra.mxu0 %v206
  %680 = vmatprep.subr.mxu0 0.0
  %681 = vmatpush1.msra.mxu0 %v207
  %682 = vmatprep.subr.mxu0 0.0
  %683 = vmatpush1.msra.mxu0 %v208
  %684 = vmatprep.subr.mxu0 0.0
  %685 = vmatpush1.msra.mxu0 %v209
  %686 = vmatprep.subr.mxu0 0.0
  %687 = vmatpush1.msra.mxu0 0.0
  %688 = vmatprep.subr.mxu0 0.0
  %689 = vmatpush1.msra.mxu0 0.0
  %690 = vmatprep.subr.mxu0 0.0
  %691 = vmatpush1.msra.mxu0 0.0
  %692 = vmatprep.subr.mxu0 0.0
  %693 = vmatpush1.msra.mxu0 0.0
  %694 = vmatprep.subr.mxu0 0.0
  %695 = vmatpush1.msra.mxu0 0.0
  %696 = vmatprep.subr.mxu0 0.0
  %697 = vmatpush1.msra.mxu0 0.0
  %698 = vmatprep.subr.mxu0 0.0
  %699 = vmatpush1.msra.mxu0 0.0
  %700 = vmatprep.subr.mxu0 0.0
  %701 = vmatpush1.msra.mxu0 0.0
  %702 = vmatprep.subr.mxu0 0.0
  %703 = vmatpush1.msra.mxu0 0.0
  %704 = vmatprep.subr.mxu0 0.0
  %705 = vmatpush1.msra.mxu0 0.0
  %706 = vmatprep.subr.mxu0 0.0
  %707 = vmatpush1.msra.mxu0 0.0
  %708 = vmatprep.subr.mxu0 0.0
  %709 = vmatpush1.msra.mxu0 0.0
  %710 = vmatprep.subr.mxu0 0.0
  %711 = vmatpush1.msra.mxu0 0.0
  %712 = vmatprep.subr.mxu0 0.0
  %713 = vmatpush1.msra.mxu0 0.0
  %714 = vmatprep.subr.mxu0 0.0
  %715 = vmatpush1.msra.mxu0 0.0
  %716 = vmatprep.subr.mxu0 0.0
  %717 = vmatpush1.msra.mxu0 0.0
  %718 = vmatprep.mubr.f32.mxu0 0.0
  %719 = vmatmul.mubr.f32.gmra.mrb[0].mxu0 %v651
  %v720 = vpop.f32.mrb[0].mxu0
  %v721 = vadd.f32 0.0, %v720
  %v722 = vpop.f32.mrb[0].mxu0
  %723 = vdwg.mxu0
  %v724 = vadd.f32 %v653, %v721
  %v725 = vmax.f32 %v724, 0.0
  %s726 = scalar_lea.vmem [#allocation2], 56
  %v727 = vld [vmem:[%s726] sm:$0xff]
  %728 = vmatprep.subr.mxu0 0.0
  %729 = vmatpush1.msra.mxu0 %v194
  %730 = vmatprep.subr.mxu0 0.0
  %731 = vmatpush1.msra.mxu0 %v195
  %732 = vmatprep.subr.mxu0 0.0
  %733 = vmatpush1.msra.mxu0 %v196
  %734 = vmatprep.subr.mxu0 0.0
  %735 = vmatpush1.msra.mxu0 %v197
  %736 = vmatprep.subr.mxu0 0.0
  %737 = vmatpush1.msra.mxu0 %v198
  %738 = vmatprep.subr.mxu0 0.0
  %739 = vmatpush1.msra.mxu0 %v199
  %740 = vmatprep.subr.mxu0 0.0
  %741 = vmatpush1.msra.mxu0 %v200
  %742 = vmatprep.subr.mxu0 0.0
  %743 = vmatpush1.msra.mxu0 %v201
  %744 = vmatprep.subr.mxu0 0.0
  %745 = vmatpush1.msra.mxu0 %v202
  %746 = vmatprep.subr.mxu0 0.0
  %747 = vmatpush1.msra.mxu0 %v203
  %748 = vmatprep.subr.mxu0 0.0
  %749 = vmatpush1.msra.mxu0 %v204
  %750 = vmatprep.subr.mxu0 0.0
  %751 = vmatpush1.msra.mxu0 %v205
  %752 = vmatprep.subr.mxu0 0.0
  %753 = vmatpush1.msra.mxu0 %v206
  %754 = vmatprep.subr.mxu0 0.0
  %755 = vmatpush1.msra.mxu0 %v207
  %756 = vmatprep.subr.mxu0 0.0
  %757 = vmatpush1.msra.mxu0 %v208
  %758 = vmatprep.subr.mxu0 0.0
  %759 = vmatpush1.msra.mxu0 %v209
  %760 = vmatprep.subr.mxu0 0.0
  %761 = vmatpush1.msra.mxu0 0.0
  %762 = vmatprep.subr.mxu0 0.0
  %763 = vmatpush1.msra.mxu0 0.0
  %764 = vmatprep.subr.mxu0 0.0
  %765 = vmatpush1.msra.mxu0 0.0
  %766 = vmatprep.subr.mxu0 0.0
  %767 = vmatpush1.msra.mxu0 0.0
  %768 = vmatprep.subr.mxu0 0.0
  %769 = vmatpush1.msra.mxu0 0.0
  %770 = vmatprep.subr.mxu0 0.0
  %771 = vmatpush1.msra.mxu0 0.0
  %772 = vmatprep.subr.mxu0 0.0
  %773 = vmatpush1.msra.mxu0 0.0
  %774 = vmatprep.subr.mxu0 0.0
  %775 = vmatpush1.msra.mxu0 0.0
  %776 = vmatprep.subr.mxu0 0.0
  %777 = vmatpush1.msra.mxu0 0.0
  %778 = vmatprep.subr.mxu0 0.0
  %779 = vmatpush1.msra.mxu0 0.0
  %780 = vmatprep.subr.mxu0 0.0
  %781 = vmatpush1.msra.mxu0 0.0
  %782 = vmatprep.subr.mxu0 0.0
  %783 = vmatpush1.msra.mxu0 0.0
  %784 = vmatprep.subr.mxu0 0.0
  %785 = vmatpush1.msra.mxu0 0.0
  %786 = vmatprep.subr.mxu0 0.0
  %787 = vmatpush1.msra.mxu0 0.0
  %788 = vmatprep.subr.mxu0 0.0
  %789 = vmatpush1.msra.mxu0 0.0
  %790 = vmatprep.subr.mxu0 0.0
  %791 = vmatpush1.msra.mxu0 0.0
  %792 = vmatprep.mubr.f32.mxu0 0.0
  %793 = vmatmul.mubr.f32.gmra.mrb[0].mxu0 %v725
  %v794 = vpop.f32.mrb[0].mxu0
  %v795 = vadd.f32 0.0, %v794
  %v796 = vpop.f32.mrb[0].mxu0
  %797 = vdwg.mxu0
  %v798 = vadd.f32 %v727, %v795
  %v799 = vmax.f32 %v798, 0.0
  %800 = vst [vmem:[#allocation3] sm:$0xff] %v799
  // Predicated region
  $region34: #{generic_rnn_forward.1} parent=0 // pred_check
    %p801 = pneg %p28
  $region35: #{generic_rnn_forward.1} parent=0 // pred_check_branch
    %803 = sbr.rel (%p801) target = $region37
  $region36: #{generic_rnn_forward.1} parent=0 // pred_region
    %v804 = vld [vmem:[#allocation3] sm:$0xff]
    %805 = vst [vmem:[%s8] sm:$0xff] %v804
    %v806 = vld [vmem:[%s5] sm:$0xff]
    %v807 = vld [vmem:[%s5 + $0x8] sm:$0xff]
    %v808 = vld [vmem:[%s5 + $0x10] sm:$0xff]
    %v809 = vld [vmem:[%s5 + $0x18] sm:$0xff]
    %v810 = vld [vmem:[%s5 + $0x20] sm:$0xff]
    %v811 = vld [vmem:[%s5 + $0x28] sm:$0xff]
    %v812 = vld [vmem:[%s5 + $0x30] sm:$0xff]
    %v813 = vld [vmem:[%s5 + $0x38] sm:$0xff]
    %v814 = vld [vmem:[%s5 + $0x40] sm:$0xff]
    %v815 = vld [vmem:[%s5 + $0x48] sm:$0xff]
    %v816 = vld [vmem:[%s5 + $0x50] sm:$0xff]
    %v817 = vld [vmem:[%s5 + $0x58] sm:$0xff]
    %v818 = vld [vmem:[%s5 + $0x60] sm:$0xff]
    %v819 = vld [vmem:[%s5 + $0x68] sm:$0xff]
    %v820 = vld [vmem:[%s5 + $0x70] sm:$0xff]
    %v821 = vld [vmem:[%s5 + $0x78] sm:$0xff]
    %v822 = vld [vmem:[%s6] sm:$0x1]
    %v824 = vlaneseq
    %v825 = vshrl.u32 %v824, 7
    %v826 = vsub.s32 0, %v825
    %v827 = vrot.slane %v822, %v826
    %829 = vmatprep.subr.mxu0 0.0
    %830 = vmatpush1.msra.mxu0 %v806
    %831 = vmatprep.subr.mxu0 0.0
    %832 = vmatpush1.msra.mxu0 %v807
    %833 = vmatprep.subr.mxu0 0.0
    %834 = vmatpush1.msra.mxu0 %v808
    %835 = vmatprep.subr.mxu0 0.0
    %836 = vmatpush1.msra.mxu0 %v809
    %837 = vmatprep.subr.mxu0 0.0
    %838 = vmatpush1.msra.mxu0 %v810
    %839 = vmatprep.subr.mxu0 0.0
    %840 = vmatpush1.msra.mxu0 %v811
    %841 = vmatprep.subr.mxu0 0.0
    %842 = vmatpush1.msra.mxu0 %v812
    %843 = vmatprep.subr.mxu0 0.0
    %844 = vmatpush1.msra.mxu0 %v813
    %845 = vmatprep.subr.mxu0 0.0
    %846 = vmatpush1.msra.mxu0 %v814
    %847 = vmatprep.subr.mxu0 0.0
    %848 = vmatpush1.msra.mxu0 %v815
    %849 = vmatprep.subr.mxu0 0.0
    %850 = vmatpush1.msra.mxu0 %v816
    %851 = vmatprep.subr.mxu0 0.0
    %852 = vmatpush1.msra.mxu0 %v817
    %853 = vmatprep.subr.mxu0 0.0
    %854 = vmatpush1.msra.mxu0 %v818
    %855 = vmatprep.subr.mxu0 0.0
    %856 = vmatpush1.msra.mxu0 %v819
    %857 = vmatprep.subr.mxu0 0.0
    %858 = vmatpush1.msra.mxu0 %v820
    %859 = vmatprep.subr.mxu0 0.0
    %860 = vmatpush1.msra.mxu0 %v821
    %861 = vmatprep.subr.mxu0 0.0
    %862 = vmatpush1.msra.mxu0 0.0
    %863 = vmatprep.subr.mxu0 0.0
    %864 = vmatpush1.msra.mxu0 0.0
    %865 = vmatprep.subr.mxu0 0.0
    %866 = vmatpush1.msra.mxu0 0.0
    %867 = vmatprep.subr.mxu0 0.0
    %868 = vmatpush1.msra.mxu0 0.0
    %869 = vmatprep.subr.mxu0 0.0
    %870 = vmatpush1.msra.mxu0 0.0
    %871 = vmatprep.subr.mxu0 0.0
    %872 = vmatpush1.msra.mxu0 0.0
    %873 = vmatprep.subr.mxu0 0.0
    %874 = vmatpush1.msra.mxu0 0.0
    %875 = vmatprep.subr.mxu0 0.0
    %876 = vmatpush1.msra.mxu0 0.0
    %877 = vmatprep.subr.mxu0 0.0
    %878 = vmatpush1.msra.mxu0 0.0
    %879 = vmatprep.subr.mxu0 0.0
    %880 = vmatpush1.msra.mxu0 0.0
    %881 = vmatprep.subr.mxu0 0.0
    %882 = vmatpush1.msra.mxu0 0.0
    %883 = vmatprep.subr.mxu0 0.0
    %884 = vmatpush1.msra.mxu0 0.0
    %885 = vmatprep.subr.mxu0 0.0
    %886 = vmatpush1.msra.mxu0 0.0
    %887 = vmatprep.subr.mxu0 0.0
    %888 = vmatpush1.msra.mxu0 0.0
    %889 = vmatprep.subr.mxu0 0.0
    %890 = vmatpush1.msra.mxu0 0.0
    %891 = vmatprep.subr.mxu0 0.0
    %892 = vmatpush1.msra.mxu0 0.0
    %893 = vmatprep.mubr.f32.mxu0 0.0
    %894 = vmatmul.mubr.f32.gmra.mrb[0].mxu0 %v804
    %v895 = vpop.f32.mrb[0].mxu0
    %v896 = vadd.f32 %v827, %v895
    %v897 = vpop.f32.mrb[0].mxu0
    %898 = vdwg.mxu0
    %899 = vst [vmem:[%s7] sm:$0xff] %v896
  $region37: #{generic_rnn_forward.1} parent=0 // pred_fallthru
    _
  // Predicated region
  $region38: #{generic_rnn_forward.1} parent=0 // pred_check
    _
  $region39: #{generic_rnn_forward.1} parent=0 // pred_check_branch
    %901 = sbr.rel (0) target = $region41
  $region40: #{generic_rnn_forward.1} parent=0 // pred_region
    _
  $region41: #{generic_rnn_forward.1} parent=0 // pred_fallthru
    _
  // Predicated region
  $region42: #{generic_rnn_forward.1} parent=0 // pred_check
    _
  $region43: #{generic_rnn_forward.1} parent=0 // pred_check_branch
    %903 = sbr.rel (0) target = $region45
  $region44: #{generic_rnn_forward.1} parent=0 // pred_region
    _
  $region45: #{generic_rnn_forward.1} parent=0 // pred_fallthru
    _
  // Predicated region
  $region46: #{generic_rnn_forward.1} parent=0 // pred_check
    _
  $region47: #{generic_rnn_forward.1} parent=0 // pred_check_branch
    %905 = sbr.rel (0) target = $region49
  $region48: #{generic_rnn_forward.1} parent=0 // pred_region
    _
  $region49: #{generic_rnn_forward.1} parent=0 // pred_fallthru
    _
  // Predicated region
  $region50: #{generic_rnn_forward.1} parent=0 // pred_check
    _
  $region51: #{generic_rnn_forward.1} parent=0 // pred_check_branch
    %907 = sbr.rel (0) target = $region53
  $region52: #{generic_rnn_forward.1} parent=0 // pred_region
    _
  $region53: #{generic_rnn_forward.1} parent=0 // pred_fallthru
    _

</llo_original>
